<compile_context>
chip_gen: v7x
topology: tpu7x:2x2x1
jax: 0.10.0
libtpu: 0.0.40
codegen_flags: <defaults>
</compile_context>

<pallas_src>
import jax
import jax.numpy as jnp
from jax import lax
from jax.experimental import pallas as pl
from jax.experimental.pallas import tpu as pltpu

HIDDEN = 128


def _round_up(n, m):
    return ((n + m - 1) // m) * m


def critic_kernel(x_ref, w1_ref, b1_ref, w2_ref, b2_ref, o_ref):
    """One batch tile: y = ReLU(x @ W1^T + b1) @ W2^T + b2, with batch on the lane axis."""
    x = x_ref[...].astype(jnp.bfloat16)                      # [TB, S] cast in-kernel (tiny)
    # Layer 1 on the MXU, A @ B^T form (contract last dims), f32 accumulate:
    #   h_T[o, b] = sum_s W1[o, s] * x[b, s]   -> [HIDDEN, TB]
    # TODO(synk): verify via pl.lower_as_mlir that Mosaic doesn't materialize a vxpose of the
    #             [TB, S] x tile for this transposed-RHS contraction (review item; expected small).
    h = lax.dot_general(
        w1_ref[...], x,
        dimension_numbers=(((1,), (1,)), ((), ())),
        preferred_element_type=jnp.float32)                  # [HIDDEN, TB] f32
    h = jnp.maximum(h + b1_ref[...], 0.0)                    # bias bcast over lanes + ReLU (f32 VPU, v5e-safe)
    # Layer 2 as an MXU matvec (natural ((1,),(0,)) contraction, no transposes):
    #   y[0, b] = sum_o W2[0, o] * h[o, b]     -> lane-dense [1, TB]
    y = lax.dot_general(
        w2_ref[...], h,
        dimension_numbers=(((1,), (0,)), ((), ())),
        preferred_element_type=jnp.float32)                  # [1, TB] f32
    o_ref[...] = (y + b2_ref[0]).astype(o_ref.dtype)


def critic_forward(x, w1, b1, w2, b2, *, block_b=8192):
    """Critic forward pass.

    x:  [B, S] float32
    Params in PyTorch nn.Linear layout: w1 [128, S], b1 [128], w2 [1, 128], b2 [1].
    Returns [B, 1] float32.
    """
    B, S = x.shape

    # Batch tile: multiple of 128 (lane-dense output rows), big enough (~1 MiB of x per step
    # at S=32) to amortize per-grid-step overhead, capped so tiny batches don't over-pad.
    tb = min(block_b, _round_up(B, 128))
    num_tiles = pl.cdiv(B, tb)
    # v7x megacore: keep at least 2 grid tiles when the batch can be split (harmless on v5e/v6e).
    if num_tiles < 2 and tb > 128:
        tb = _round_up(pl.cdiv(tb, 2), 128)
        num_tiles = pl.cdiv(B, tb)

    # One-time tiny parameter re-layouts (no passes over the big x tensor).
    w1_b = w1.astype(jnp.bfloat16)                              # [128, S]  (bf16 at the MXU)
    b1_c = b1.reshape(HIDDEN, 1).astype(jnp.float32)            # column -> broadcast over lanes
    w2_r = w2.reshape(1, HIDDEN).astype(jnp.float32)            # row for the layer-2 MXU matvec
    b2_s = b2.reshape(1).astype(jnp.float32)                    # scalar, lives in SMEM

    const = lambda i: (0, 0)    # weights/biases: same block every step -> stay VMEM-resident
    out = pl.pallas_call(
        critic_kernel,
        out_shape=jax.ShapeDtypeStruct((num_tiles, tb), jnp.float32),
        grid=(num_tiles,),
        in_specs=[
            pl.BlockSpec((tb, S), lambda i: (i, 0)),            # x: tiled over batch (ragged edge OK)
            pl.BlockSpec((HIDDEN, S), const),                   # W1 (resident)
            pl.BlockSpec((HIDDEN, 1), const),                   # b1 column (resident)
            pl.BlockSpec((1, HIDDEN), const),                   # W2 row (resident)
            pl.BlockSpec(memory_space=pltpu.MemorySpace.SMEM),  # b2 scalar in SMEM
        ],
        out_specs=pl.BlockSpec((1, tb), lambda i: (i, 0)),      # lane-dense output row per tile
        compiler_params=pltpu.CompilerParams(
            dimension_semantics=("parallel",),                  # batch tiles independent -> megacore
            vmem_limit_bytes=32 * 1024 * 1024),                 # fits v5e/v6e/v7x scoped VMEM at tb=8192
    )(x, w1_b, b1_c, w2_r, b2_s)

    # (num_tiles, tb) lane-dense slab -> (B, 1); edge-block garbage columns are sliced off here.
    return out.reshape(num_tiles * tb)[:B].reshape(B, 1)


def init_params(key, state_dim, hidden=HIDDEN):
    # PyTorch default Linear init: U(-1/sqrt(fan_in), 1/sqrt(fan_in)), PyTorch weight layout.
    k1, k2, k3, k4 = jax.random.split(key, 4)
    bound1 = 1.0 / jnp.sqrt(jnp.float32(state_dim))
    bound2 = 1.0 / jnp.sqrt(jnp.float32(hidden))
    w1 = jax.random.uniform(k1, (hidden, state_dim), jnp.float32, -bound1, bound1)
    b1 = jax.random.uniform(k2, (hidden,), jnp.float32, -bound1, bound1)
    w2 = jax.random.uniform(k3, (1, hidden), jnp.float32, -bound2, bound2)
    b2 = jax.random.uniform(k4, (1,), jnp.float32, -bound2, bound2)
    return w1, b1, w2, b2


if __name__ == "__main__":
    key = jax.random.PRNGKey(0)
    kx, kp = jax.random.split(key)

    batch, state_dim = 8, 32
    x = jax.random.normal(kx, (batch, state_dim), dtype=jnp.float32)
    w1, b1, w2, b2 = init_params(kp, state_dim)

    out = jax.block_until_ready(critic_forward(x, w1, b1, w2, b2))

    # Reference in plain f32 JAX (PyTorch semantics: x @ W^T + b).
    ref = jnp.maximum(x @ w1.T + b1, 0.0) @ w2.T + b2
    assert out.shape == (batch, 1)
    # bf16 x/W1 at the layer-1 MXU -> loosened tolerance.
    assert jnp.allclose(out, ref, atol=2e-2, rtol=2e-2), float(jnp.max(jnp.abs(out - ref)))

    print("KERNEL_OK")
</pallas_src>

<mosaic_0001>
module attributes {stable_mosaic.version = 11 : i64} {
  func.func @critic_kernel(%arg0: i32, %arg1: memref<128x32xf32, #tpu.memory_space<vmem>>, %arg2: memref<128x32xbf16, #tpu.memory_space<vmem>>, %arg3: memref<128x1xf32, #tpu.memory_space<vmem>>, %arg4: memref<1x128xf32, #tpu.memory_space<vmem>>, %arg5: memref<1xf32, #tpu.memory_space<smem>>, %arg6: memref<1x128xf32, #tpu.memory_space<vmem>>) attributes {dimension_semantics = [#tpu.dimension_semantics<parallel>], iteration_bounds = array<i64: 1>, scalar_prefetch = 0 : i64, scratch_operands = 0 : i64, tpu.core_type = #tpu.core_type<tc>, window_params = [{transform_indices = @transform_0, window_bounds = array<i64: 128, 32>}, {pipeline_mode = #tpu.pipeline_mode<synchronous>, transform_indices = @transform_1, window_bounds = array<i64: 128, 32>}, {pipeline_mode = #tpu.pipeline_mode<synchronous>, transform_indices = @transform_2, window_bounds = array<i64: 128, 1>}, {pipeline_mode = #tpu.pipeline_mode<synchronous>, transform_indices = @transform_3, window_bounds = array<i64: 1, 128>}, {transform_indices = @transform_4, window_bounds = array<i64: 1>}, {transform_indices = @transform_5, window_bounds = array<i64: 1, 128>}]} {
    %c0 = arith.constant 0 : index
    %c0_0 = arith.constant 0 : index
    %0 = vector.load %arg1[%c0, %c0_0] : memref<128x32xf32, #tpu.memory_space<vmem>>, vector<128x32xf32>
    %1 = arith.truncf %0 : vector<128x32xf32> to vector<128x32xbf16>
    %c0_1 = arith.constant 0 : index
    %c0_2 = arith.constant 0 : index
    %2 = vector.load %arg2[%c0_1, %c0_2] : memref<128x32xbf16, #tpu.memory_space<vmem>>, vector<128x32xbf16>
    %cst = arith.constant dense<0.000000e+00> : vector<128x128xf32>
    %3 = tpu.matmul %2, %1, %cst {dimension_numbers = #tpu.dot_dimension_numbers<[1], [1], [0], [0], [0, 0, 1, 0], [], []>} : vector<128x32xbf16>, vector<128x32xbf16>, vector<128x128xf32> -> vector<128x128xf32>
    %c0_3 = arith.constant 0 : index
    %c0_4 = arith.constant 0 : index
    %4 = vector.load %arg3[%c0_3, %c0_4] : memref<128x1xf32, #tpu.memory_space<vmem>>, vector<128x1xf32>
    %5 = vector.broadcast %4 : vector<128x1xf32> to vector<128x128xf32>
    %6 = arith.addf %3, %5 : vector<128x128xf32>
    %cst_5 = arith.constant 0.000000e+00 : f32
    %7 = vector.broadcast %cst_5 : f32 to vector<128x128xf32>
    %8 = arith.maximumf %6, %7 : vector<128x128xf32>
    %c0_6 = arith.constant 0 : index
    %c0_7 = arith.constant 0 : index
    %9 = vector.load %arg4[%c0_6, %c0_7] : memref<1x128xf32, #tpu.memory_space<vmem>>, vector<1x128xf32>
    %cst_8 = arith.constant dense<0.000000e+00> : vector<1x128xf32>
    %10 = tpu.matmul %9, %8, %cst_8 {dimension_numbers = #tpu.dot_dimension_numbers<[1], [0], [0], [1], [0, 0, 1, 1], [], []>} : vector<1x128xf32>, vector<128x128xf32>, vector<1x128xf32> -> vector<1x128xf32>
    %c0_9 = arith.constant 0 : index
    %11 = memref.load %arg5[%c0_9] : memref<1xf32, #tpu.memory_space<smem>>
    %12 = vector.broadcast %11 : f32 to vector<1x128xf32>
    %13 = arith.addf %10, %12 : vector<1x128xf32>
    %c0_10 = arith.constant 0 : index
    %c0_11 = arith.constant 0 : index
    %14 = vector.load %arg6[%c0_10, %c0_11] : memref<1x128xf32, #tpu.memory_space<vmem>>, vector<1x128xf32>
    tpu.vector_store %arg6[%c0_10, %c0_11], %13 {strides = array<i32>} : memref<1x128xf32, #tpu.memory_space<vmem>>, vector<1x128xf32>,
    return
  }
  func.func @transform_0(%arg0: i32) -> (i32, i32) {
    %c0_i32 = arith.constant 0 : i32
    %c0_i32_0 = arith.constant 0 : i32
    return %arg0, %c0_i32 : i32, i32
  }
  func.func @transform_1(%arg0: i32) -> (i32, i32) {
    %c0_i32 = arith.constant 0 : i32
    %c0_i32_0 = arith.constant 0 : i32
    %c0_i32_1 = arith.constant 0 : i32
    return %c0_i32, %c0_i32_0 : i32, i32
  }
  func.func @transform_2(%arg0: i32) -> (i32, i32) {
    %c0_i32 = arith.constant 0 : i32
    %c0_i32_0 = arith.constant 0 : i32
    %c0_i32_1 = arith.constant 0 : i32
    return %c0_i32, %c0_i32_0 : i32, i32
  }
  func.func @transform_3(%arg0: i32) -> (i32, i32) {
    %c0_i32 = arith.constant 0 : i32
    %c0_i32_0 = arith.constant 0 : i32
    %c0_i32_1 = arith.constant 0 : i32
    return %c0_i32, %c0_i32_0 : i32, i32
  }
  func.func @transform_4(%arg0: i32) -> i32 {
    %c0_i32 = arith.constant 0 : i32
    %c0_i32_0 = arith.constant 0 : i32
    return %c0_i32 : i32
  }
  func.func @transform_5(%arg0: i32) -> (i32, i32) {
    %c0_i32 = arith.constant 0 : i32
    %c0_i32_0 = arith.constant 0 : i32
    return %arg0, %c0_i32 : i32, i32
  }
}

</mosaic_0001>

<llo_original>
// kernel: tpu_custom_call.1
$region0: #{tpu_custom_call.1}
  #allocation0 [shape = 'u32[]', space=smem, size = 0x4, offset = 0x4, fixed_abs, tag = 'smem constant byte address 0x4 - core index']
  #allocation1 [shape = 'u32[144,128]{1,0:T(1,128)}', space=vmem, size = 0x12000, scoped, tag = 'internal scratch']
  #allocation2 [shape = 'f32[1]{0:T(128)S(6)}', space=smem, size = 0x200, scoped, tag = 'scoped memory for tpu_custom_call.1']
  %s0 = inlined_call_operand.vmem [shape: f32[8,32], index: 0, kind: input, shape index: {}]
  %s1 = inlined_call_operand.vmem [shape: bf16[128,32], index: 1, kind: input, shape index: {}]
  %s2 = inlined_call_operand.vmem [shape: f32[128,1], index: 2, kind: input, shape index: {}]
  %s3 = inlined_call_operand.vmem [shape: f32[1,128], index: 3, kind: input, shape index: {}]
  %s4 = inlined_call_operand.<no memory space> [shape: f32[1], index: 4, kind: input, shape index: {}]
  %s5 = inlined_call_operand.hbm [shape: f32[1,128], index: 5, kind: output, shape index: {}]
  %s6 = sld [smem:[#allocation0]]
  $region30: #{tpu_custom_call.1} parent=0
    _
  %s8 = ssub.s32 1, %s6
  %s9 = scalar_select 0, %s8, %s6
  %10 = sst [smem:[#allocation2]] %s4
  $region1: #{tpu_custom_call.1} parent=0
    #allocation3 [shape = 'u8[512]{0}', space=vmem, size = 0x400, scoped, tag = 'output window, operand 0, single buffered']
    #allocation4 [shape = 's32[1]{0}', space=sflag, size = 0x4, scoped, tag = 'scoped memory for tpu_custom_call.1']
    %11 = vsyncpa [#allocation4], 0
    // Predicated region
    $region2: #{tpu_custom_call.1} parent=1 // pred_check
      _
    $region3: #{tpu_custom_call.1} parent=1 // pred_check_branch
      %13 = sbr.rel (0) target = $region5
    $region4: #{tpu_custom_call.1} parent=1 // pred_region
      _
    $region5: #{tpu_custom_call.1} parent=1 // pred_fallthru
      _
    // Predicated region
    $region6: #{tpu_custom_call.1} parent=1 // pred_check
      _
    $region7: #{tpu_custom_call.1} parent=1 // pred_check_branch
      %15 = sbr.rel (0) target = $region9
    $region8: #{tpu_custom_call.1} parent=1 // pred_region
      _
    $region9: #{tpu_custom_call.1} parent=1 // pred_fallthru
      _
    // Predicated region
    $region10: #{tpu_custom_call.1} parent=1 // pred_check
      _
    $region11: #{tpu_custom_call.1} parent=1 // pred_check_branch
      %17 = sbr.rel (0) target = $region13
    $region12: #{tpu_custom_call.1} parent=1 // pred_region
      _
    $region13: #{tpu_custom_call.1} parent=1 // pred_fallthru
      _
    // Predicated region
    $region14: #{tpu_custom_call.1} parent=1 // pred_check
      _
    $region15: #{tpu_custom_call.1} parent=1 // pred_check_branch
      %19 = sbr.rel (0) target = $region17
    $region16: #{tpu_custom_call.1} parent=1 // pred_region
      _
    $region17: #{tpu_custom_call.1} parent=1 // pred_fallthru
      _
    // Predicated region
    $region18: #{tpu_custom_call.1} parent=1 // pred_check
      _
    $region19: #{tpu_custom_call.1} parent=1 // pred_check_branch
      %21 = sbr.rel (0) target = $region21
    $region20: #{tpu_custom_call.1} parent=1 // pred_region
      _
    $region21: #{tpu_custom_call.1} parent=1 // pred_fallthru
      _
    %v23 = vld [vmem:[%s0] sm:$0xff]
    %v24 = vld [vmem:[%s0 + $0x8] sm:$0xff]
    %v25 = vld [vmem:[%s0 + $0x10] sm:$0xff]
    %v26 = vld [vmem:[%s0 + $0x18] sm:$0xff]
    %v27 = vld [vmem:[%s0 + $0x20] sm:$0xff]
    %v28 = vld [vmem:[%s0 + $0x28] sm:$0xff]
    %v29 = vld [vmem:[%s0 + $0x30] sm:$0xff]
    %v30 = vld [vmem:[%s0 + $0x38] sm:$0xff]
    %v31 = vld [vmem:[%s0 + $0x40] sm:$0xff]
    %v32 = vld [vmem:[%s0 + $0x48] sm:$0xff]
    %v33 = vld [vmem:[%s0 + $0x50] sm:$0xff]
    %v34 = vld [vmem:[%s0 + $0x58] sm:$0xff]
    %v35 = vld [vmem:[%s0 + $0x60] sm:$0xff]
    %v36 = vld [vmem:[%s0 + $0x68] sm:$0xff]
    %v37 = vld [vmem:[%s0 + $0x70] sm:$0xff]
    %v38 = vld [vmem:[%s0 + $0x78] sm:$0xff]
    %v39 = vpack.c.bf16 %v24, %v23
    %v40 = vpack.c.bf16 %v26, %v25
    %v41 = vpack.c.bf16 %v28, %v27
    %v42 = vpack.c.bf16 %v30, %v29
    %v43 = vpack.c.bf16 %v32, %v31
    %v44 = vpack.c.bf16 %v34, %v33
    %v45 = vpack.c.bf16 %v36, %v35
    %v46 = vpack.c.bf16 %v38, %v37
    %v47 = vld [vmem:[%s1] sm:$0xf]
    %v48 = vld [vmem:[%s1 + $0x4] sm:$0xf]
    %v49 = vld [vmem:[%s1 + $0x8] sm:$0xf]
    %v50 = vld [vmem:[%s1 + $0xc] sm:$0xf]
    %v51 = vld [vmem:[%s1 + $0x10] sm:$0xf]
    %v52 = vld [vmem:[%s1 + $0x14] sm:$0xf]
    %v53 = vld [vmem:[%s1 + $0x18] sm:$0xf]
    %v54 = vld [vmem:[%s1 + $0x1c] sm:$0xf]
    %v55 = vld [vmem:[%s1 + $0x20] sm:$0xf]
    %v56 = vld [vmem:[%s1 + $0x24] sm:$0xf]
    %v57 = vld [vmem:[%s1 + $0x28] sm:$0xf]
    %v58 = vld [vmem:[%s1 + $0x2c] sm:$0xf]
    %v59 = vld [vmem:[%s1 + $0x30] sm:$0xf]
    %v60 = vld [vmem:[%s1 + $0x34] sm:$0xf]
    %v61 = vld [vmem:[%s1 + $0x38] sm:$0xf]
    %v62 = vld [vmem:[%s1 + $0x3c] sm:$0xf]
    %v63 = vld [vmem:[%s2] sm:$0xff]
    %v64 = vld [vmem:[%s2 + $0x8] sm:$0xff]
    %v65 = vld [vmem:[%s2 + $0x10] sm:$0xff]
    %v66 = vld [vmem:[%s2 + $0x18] sm:$0xff]
    %v67 = vld [vmem:[%s2 + $0x20] sm:$0xff]
    %v68 = vld [vmem:[%s2 + $0x28] sm:$0xff]
    %v69 = vld [vmem:[%s2 + $0x30] sm:$0xff]
    %v70 = vld [vmem:[%s2 + $0x38] sm:$0xff]
    %v71 = vld [vmem:[%s2 + $0x40] sm:$0xff]
    %v72 = vld [vmem:[%s2 + $0x48] sm:$0xff]
    %v73 = vld [vmem:[%s2 + $0x50] sm:$0xff]
    %v74 = vld [vmem:[%s2 + $0x58] sm:$0xff]
    %v75 = vld [vmem:[%s2 + $0x60] sm:$0xff]
    %v76 = vld [vmem:[%s2 + $0x68] sm:$0xff]
    %v77 = vld [vmem:[%s2 + $0x70] sm:$0xff]
    %v78 = vld [vmem:[%s2 + $0x78] sm:$0xff]
    %80 = vset.pattern.permute.xlu0 0
    %81 = vperm.xlu0 %80, %v63
    %v82 = vpop.permute.xlu0 %81
    %85 = vset.pattern.permute.xlu0 0
    %86 = vperm.xlu0 %85, %v64
    %v87 = vpop.permute.xlu0 %86
    %90 = vset.pattern.permute.xlu0 0
    %91 = vperm.xlu0 %90, %v65
    %v92 = vpop.permute.xlu0 %91
    %95 = vset.pattern.permute.xlu0 0
    %96 = vperm.xlu0 %95, %v66
    %v97 = vpop.permute.xlu0 %96
    %100 = vset.pattern.permute.xlu0 0
    %101 = vperm.xlu0 %100, %v67
    %v102 = vpop.permute.xlu0 %101
    %105 = vset.pattern.permute.xlu0 0
    %106 = vperm.xlu0 %105, %v68
    %v107 = vpop.permute.xlu0 %106
    %110 = vset.pattern.permute.xlu0 0
    %111 = vperm.xlu0 %110, %v69
    %v112 = vpop.permute.xlu0 %111
    %115 = vset.pattern.permute.xlu0 0
    %116 = vperm.xlu0 %115, %v70
    %v117 = vpop.permute.xlu0 %116
    %120 = vset.pattern.permute.xlu0 0
    %121 = vperm.xlu0 %120, %v71
    %v122 = vpop.permute.xlu0 %121
    %125 = vset.pattern.permute.xlu0 0
    %126 = vperm.xlu0 %125, %v72
    %v127 = vpop.permute.xlu0 %126
    %130 = vset.pattern.permute.xlu0 0
    %131 = vperm.xlu0 %130, %v73
    %v132 = vpop.permute.xlu0 %131
    %135 = vset.pattern.permute.xlu0 0
    %136 = vperm.xlu0 %135, %v74
    %v137 = vpop.permute.xlu0 %136
    %140 = vset.pattern.permute.xlu0 0
    %141 = vperm.xlu0 %140, %v75
    %v142 = vpop.permute.xlu0 %141
    %145 = vset.pattern.permute.xlu0 0
    %146 = vperm.xlu0 %145, %v76
    %v147 = vpop.permute.xlu0 %146
    %150 = vset.pattern.permute.xlu0 0
    %151 = vperm.xlu0 %150, %v77
    %v152 = vpop.permute.xlu0 %151
    %155 = vset.pattern.permute.xlu0 0
    %156 = vperm.xlu0 %155, %v78
    %v157 = vpop.permute.xlu0 %156
    %v175 = vunpack.c.l.b16 %v47
    %v176 = vunpack.c.l.b16 %v48
    %v177 = vunpack.c.l.b16 %v49
    %v178 = vunpack.c.l.b16 %v50
    %v179 = vunpack.c.l.b16 %v51
    %v180 = vunpack.c.l.b16 %v52
    %v181 = vunpack.c.l.b16 %v53
    %v182 = vunpack.c.l.b16 %v54
    %v183 = vunpack.c.l.b16 %v55
    %v184 = vunpack.c.l.b16 %v56
    %v185 = vunpack.c.l.b16 %v57
    %v186 = vunpack.c.l.b16 %v58
    %v187 = vunpack.c.l.b16 %v59
    %v188 = vunpack.c.l.b16 %v60
    %v189 = vunpack.c.l.b16 %v61
    %v190 = vunpack.c.l.b16 %v62
    %v191 = vpack.c.b16 %v176, %v175
    %v192 = vpack.c.b16 %v178, %v177
    %v193 = vpack.c.b16 %v180, %v179
    %v194 = vpack.c.b16 %v182, %v181
    %v195 = vpack.c.b16 %v184, %v183
    %v196 = vpack.c.b16 %v186, %v185
    %v197 = vpack.c.b16 %v188, %v187
    %v198 = vpack.c.b16 %v190, %v189
    %vm199 = vcmask 261120
    %v201 = vsel %vm199, %v191, 0
    %v204 = vsel %vm199, %v192, 0
    %v207 = vsel %vm199, %v193, 0
    %v210 = vsel %vm199, %v194, 0
    %v213 = vsel %vm199, %v195, 0
    %v216 = vsel %vm199, %v196, 0
    %v219 = vsel %vm199, %v197, 0
    %v222 = vsel %vm199, %v198, 0
    %v225 = vsel %vm199, %v39, 0
    %v228 = vsel %vm199, %v40, 0
    %v231 = vsel %vm199, %v41, 0
    %v234 = vsel %vm199, %v42, 0
    %v237 = vsel %vm199, %v43, 0
    %v240 = vsel %vm199, %v44, 0
    %v243 = vsel %vm199, %v45, 0
    %v246 = vsel %vm199, %v46, 0
    %248 = vmatprep.subr.bf16.mxu0 0
    %249 = vmatpush1.bf16.xpose.msra.mxu0 %v225
    %250 = vmatprep.subr.bf16.mxu0 0
    %251 = vmatpush1.bf16.xpose.msra.mxu0 %v228
    %252 = vmatprep.subr.bf16.mxu0 0
    %253 = vmatpush1.bf16.xpose.msra.mxu0 %v231
    %254 = vmatprep.subr.bf16.mxu0 0
    %255 = vmatpush1.bf16.xpose.msra.mxu0 %v234
    %256 = vmatprep.subr.bf16.mxu0 0
    %257 = vmatpush1.bf16.xpose.msra.mxu0 %v237
    %258 = vmatprep.subr.bf16.mxu0 0
    %259 = vmatpush1.bf16.xpose.msra.mxu0 %v240
    %260 = vmatprep.subr.bf16.mxu0 0
    %261 = vmatpush1.bf16.xpose.msra.mxu0 %v243
    %262 = vmatprep.subr.bf16.mxu0 0
    %263 = vmatpush1.bf16.xpose.msra.mxu0 %v246
    %264 = vmatprep.subr.bf16.mxu0 0
    %265 = vmatpush1.bf16.xpose.msra.mxu0 0
    %266 = vmatprep.subr.bf16.mxu0 0
    %267 = vmatpush1.bf16.xpose.msra.mxu0 0
    %268 = vmatprep.subr.bf16.mxu0 0
    %269 = vmatpush1.bf16.xpose.msra.mxu0 0
    %270 = vmatprep.subr.bf16.mxu0 0
    %271 = vmatpush1.bf16.xpose.msra.mxu0 0
    %272 = vmatprep.subr.bf16.mxu0 0
    %273 = vmatpush1.bf16.xpose.msra.mxu0 0
    %274 = vmatprep.subr.bf16.mxu0 0
    %275 = vmatpush1.bf16.xpose.msra.mxu0 0
    %276 = vmatprep.subr.bf16.mxu0 0
    %277 = vmatpush1.bf16.xpose.msra.mxu0 0
    %278 = vmatprep.subr.bf16.mxu0 0
    %279 = vmatpush1.bf16.xpose.msra.mxu0 0
    %280 = vmatprep.mubr.bf16.mxu0 0
    %281 = vmatmul.mubr.bf16.gmra.mrb[0].mxu0 %v201
    %v282 = vpop.f32.mrb[0].mxu0
    %v283 = vadd.f32 %v82, %v282
    %v284 = vpop.f32.mrb[0].mxu0
    %v285 = vpop.f32.mrb[0].mxu0
    %v286 = vadd.f32 %v87, %v285
    %v287 = vpop.f32.mrb[0].mxu0
    %288 = vmatprep.mubr.bf16.mxu0 0
    %289 = vmatmul.mubr.bf16.gmra.mrb[0].mxu0 %v204
    %v290 = vpop.f32.mrb[0].mxu0
    %v291 = vadd.f32 %v92, %v290
    %v292 = vpop.f32.mrb[0].mxu0
    %v293 = vpop.f32.mrb[0].mxu0
    %v294 = vadd.f32 %v97, %v293
    %v295 = vpop.f32.mrb[0].mxu0
    %296 = vmatprep.mubr.bf16.mxu0 0
    %297 = vmatmul.mubr.bf16.gmra.mrb[0].mxu0 %v207
    %v298 = vpop.f32.mrb[0].mxu0
    %v299 = vadd.f32 %v102, %v298
    %v300 = vpop.f32.mrb[0].mxu0
    %v301 = vpop.f32.mrb[0].mxu0
    %v302 = vadd.f32 %v107, %v301
    %v303 = vpop.f32.mrb[0].mxu0
    %304 = vmatprep.mubr.bf16.mxu0 0
    %305 = vmatmul.mubr.bf16.gmra.mrb[0].mxu0 %v210
    %v306 = vpop.f32.mrb[0].mxu0
    %v307 = vadd.f32 %v112, %v306
    %v308 = vpop.f32.mrb[0].mxu0
    %v309 = vpop.f32.mrb[0].mxu0
    %v310 = vadd.f32 %v117, %v309
    %v311 = vpop.f32.mrb[0].mxu0
    %312 = vmatprep.mubr.bf16.mxu0 0
    %313 = vmatmul.mubr.bf16.gmra.mrb[0].mxu0 %v213
    %v314 = vpop.f32.mrb[0].mxu0
    %v315 = vadd.f32 %v122, %v314
    %v316 = vpop.f32.mrb[0].mxu0
    %v317 = vpop.f32.mrb[0].mxu0
    %v318 = vadd.f32 %v127, %v317
    %v319 = vpop.f32.mrb[0].mxu0
    %320 = vmatprep.mubr.bf16.mxu0 0
    %321 = vmatmul.mubr.bf16.gmra.mrb[0].mxu0 %v216
    %v322 = vpop.f32.mrb[0].mxu0
    %v323 = vadd.f32 %v132, %v322
    %v324 = vpop.f32.mrb[0].mxu0
    %v325 = vpop.f32.mrb[0].mxu0
    %v326 = vadd.f32 %v137, %v325
    %v327 = vpop.f32.mrb[0].mxu0
    %328 = vmatprep.mubr.bf16.mxu0 0
    %329 = vmatmul.mubr.bf16.gmra.mrb[0].mxu0 %v219
    %v330 = vpop.f32.mrb[0].mxu0
    %v331 = vadd.f32 %v142, %v330
    %v332 = vpop.f32.mrb[0].mxu0
    %v333 = vpop.f32.mrb[0].mxu0
    %v334 = vadd.f32 %v147, %v333
    %v335 = vpop.f32.mrb[0].mxu0
    %336 = vmatprep.mubr.bf16.mxu0 0
    %337 = vmatmul.mubr.bf16.gmra.mrb[0].mxu0 %v222
    %v338 = vpop.f32.mrb[0].mxu0
    %v339 = vadd.f32 %v152, %v338
    %v340 = vpop.f32.mrb[0].mxu0
    %v341 = vpop.f32.mrb[0].mxu0
    %v342 = vadd.f32 %v157, %v341
    %v343 = vpop.f32.mrb[0].mxu0
    %344 = vdwg.mxu0
    %v345 = vmax.f32 %v283, 0.0
    %v346 = vmax.f32 %v286, 0.0
    %v347 = vmax.f32 %v291, 0.0
    %v348 = vmax.f32 %v294, 0.0
    %v349 = vmax.f32 %v299, 0.0
    %v350 = vmax.f32 %v302, 0.0
    %v351 = vmax.f32 %v307, 0.0
    %v352 = vmax.f32 %v310, 0.0
    %v353 = vmax.f32 %v315, 0.0
    %v354 = vmax.f32 %v318, 0.0
    %v355 = vmax.f32 %v323, 0.0
    %v356 = vmax.f32 %v326, 0.0
    %v357 = vmax.f32 %v331, 0.0
    %v358 = vmax.f32 %v334, 0.0
    %v359 = vmax.f32 %v339, 0.0
    %v360 = vmax.f32 %v342, 0.0
    %v361 = vld [vmem:[%s3] sm:$0x1]
    %s362 = sld [smem:[#allocation2]]
    %v363 = vstv %s362
    %364 = vmatprep.subr.mxu0 0.0
    %365 = vmatpush1.msra.mxu0 %v345
    %366 = vmatprep.subr.mxu0 0.0
    %367 = vmatpush1.msra.mxu0 %v346
    %368 = vmatprep.subr.mxu0 0.0
    %369 = vmatpush1.msra.mxu0 %v347
    %370 = vmatprep.subr.mxu0 0.0
    %371 = vmatpush1.msra.mxu0 %v348
    %372 = vmatprep.subr.mxu0 0.0
    %373 = vmatpush1.msra.mxu0 %v349
    %374 = vmatprep.subr.mxu0 0.0
    %375 = vmatpush1.msra.mxu0 %v350
    %376 = vmatprep.subr.mxu0 0.0
    %377 = vmatpush1.msra.mxu0 %v351
    %378 = vmatprep.subr.mxu0 0.0
    %379 = vmatpush1.msra.mxu0 %v352
    %380 = vmatprep.subr.mxu0 0.0
    %381 = vmatpush1.msra.mxu0 %v353
    %382 = vmatprep.subr.mxu0 0.0
    %383 = vmatpush1.msra.mxu0 %v354
    %384 = vmatprep.subr.mxu0 0.0
    %385 = vmatpush1.msra.mxu0 %v355
    %386 = vmatprep.subr.mxu0 0.0
    %387 = vmatpush1.msra.mxu0 %v356
    %388 = vmatprep.subr.mxu0 0.0
    %389 = vmatpush1.msra.mxu0 %v357
    %390 = vmatprep.subr.mxu0 0.0
    %391 = vmatpush1.msra.mxu0 %v358
    %392 = vmatprep.subr.mxu0 0.0
    %393 = vmatpush1.msra.mxu0 %v359
    %394 = vmatprep.subr.mxu0 0.0
    %395 = vmatpush1.msra.mxu0 %v360
    %396 = vmatprep.subr.mxu0 0.0
    %397 = vmatpush1.msra.mxu0 0.0
    %398 = vmatprep.subr.mxu0 0.0
    %399 = vmatpush1.msra.mxu0 0.0
    %400 = vmatprep.subr.mxu0 0.0
    %401 = vmatpush1.msra.mxu0 0.0
    %402 = vmatprep.subr.mxu0 0.0
    %403 = vmatpush1.msra.mxu0 0.0
    %404 = vmatprep.subr.mxu0 0.0
    %405 = vmatpush1.msra.mxu0 0.0
    %406 = vmatprep.subr.mxu0 0.0
    %407 = vmatpush1.msra.mxu0 0.0
    %408 = vmatprep.subr.mxu0 0.0
    %409 = vmatpush1.msra.mxu0 0.0
    %410 = vmatprep.subr.mxu0 0.0
    %411 = vmatpush1.msra.mxu0 0.0
    %412 = vmatprep.subr.mxu0 0.0
    %413 = vmatpush1.msra.mxu0 0.0
    %414 = vmatprep.subr.mxu0 0.0
    %415 = vmatpush1.msra.mxu0 0.0
    %416 = vmatprep.subr.mxu0 0.0
    %417 = vmatpush1.msra.mxu0 0.0
    %418 = vmatprep.subr.mxu0 0.0
    %419 = vmatpush1.msra.mxu0 0.0
    %420 = vmatprep.subr.mxu0 0.0
    %421 = vmatpush1.msra.mxu0 0.0
    %422 = vmatprep.subr.mxu0 0.0
    %423 = vmatpush1.msra.mxu0 0.0
    %424 = vmatprep.subr.mxu0 0.0
    %425 = vmatpush1.msra.mxu0 0.0
    %426 = vmatprep.subr.mxu0 0.0
    %427 = vmatpush1.msra.mxu0 0.0
    %428 = vmatprep.mubr.f32.mxu0 0.0
    %429 = vmatmul.mubr.f32.gmra.mrb[0].mxu0 %v361
    %v430 = vpop.f32.mrb[0].mxu0
    %v431 = vadd.f32 %v363, %v430
    %v432 = vpop.f32.mrb[0].mxu0
    %433 = vdwg.mxu0
    %434 = vst [vmem:[#allocation3] sm:$0x1] %v431
    // Predicated region
    $region22: #{tpu_custom_call.1} parent=1 // pred_check
      _
    $region23: #{tpu_custom_call.1} parent=1 // pred_check_branch
      %436 = sbr.rel (0) target = $region25
    $region24: #{tpu_custom_call.1} parent=1 // pred_region
      %s438 = ssub.s32 16, 16
      %439 = vsyncadd [#allocation4], %s438
      %s441 = sshll.u32 [#allocation3], 4
      %s442 = int_to_ptr.vmem [resolvable:$true] %s441
      %444 = dma.vmem_to_hbm [thread:$0]  %s442, 16, %s5, [#allocation4]
    $region25: #{tpu_custom_call.1} parent=1 // pred_fallthru
      _
    // Predicated region
    $region26: #{tpu_custom_call.1} parent=1 // pred_check
      _
    $region27: #{tpu_custom_call.1} parent=1 // pred_check_branch
      %446 = sbr.rel (0) target = $region29
    $region28: #{tpu_custom_call.1} parent=1 // pred_region
      %447 = dma.done [#allocation4], 16
    $region29: #{tpu_custom_call.1} parent=1 // pred_fallthru
      _
    %448 = vsyncpa [#allocation4], 1

</llo_original>
